<compile_context>
chip_gen: v7x
topology: tpu7x:2x2x1
jax: 0.10.0
libtpu: 0.0.40
codegen_flags: <defaults>
</compile_context>

<pallas_src>
import functools

import jax
import jax.numpy as jnp
from jax import lax
from jax.experimental import pallas as pl
from jax.experimental.pallas import tpu as pltpu


def _chip_generation():
    """Best-effort TPU generation detection for tiling / VMEM-limit defaults."""
    try:
        kind = jax.devices()[0].device_kind.lower()
    except Exception:
        return "unknown"
    if "v7" in kind or "7x" in kind:
        return "v7x"
    if ("v5" in kind) or ("v6" in kind):
        return "big_vmem"          # 128 MiB physical VMEM generations
    return "unknown"


def _attention_tile(q, k, out_ref, approx_recip):
    """scores -> stable softmax -> store one (tq, N) output tile."""
    # q @ k^T without an explicit transpose: contract the Dh axis of both
    # operands (keeps the per-tile loop on MXU + VPU, no per-tile XLU vxpose).
    s = lax.dot_general(q, k, (((1,), (1,)), ((), ())),
                        preferred_element_type=jnp.float32)     # (tq, N)
    m = jnp.max(s, axis=-1, keepdims=True)
    p = jnp.exp(s - m)
    denom = jnp.sum(p, axis=-1, keepdims=True)
    attn = p * pl.reciprocal(denom, approx=approx_recip)        # EUP slot if approx
    out_ref[0, 0] = attn.astype(out_ref.dtype)


def _qk_attention_kernel_fused(x_ref, wqk_ref, out_ref, q_all_ref, k_all_ref, *,
                               num_heads, head_dim, n_valid, approx_recip):
    # x_ref:    (1, n_q_pad, C)       padded (queries only) tokens, one batch elem
    # wqk_ref:  (C, 2*H*Dh)           head-interleaved [q_0|k_0|q_1|k_1|...], q pre-scaled
    # out_ref:  (1, 1, tq, N)         attention tile for (b, h, query-tile)
    # q_all_ref: (H, n_q_pad, Dh)     per-batch scratch, persists across (h, qt)
    # k_all_ref: (H, N, Dh)
    h = pl.program_id(1)
    qt = pl.program_id(2)
    tq = out_ref.shape[2]

    # Hoisted fused projection: one full-width MXU matmul per batch element,
    # only on the first (head, query-tile) step for this batch element.
    @pl.when(jnp.logical_and(h == 0, qt == 0))
    def _project():
        x = x_ref[0]                                            # (n_q_pad, C)
        qk = jnp.dot(x, wqk_ref[...],
                     preferred_element_type=jnp.float32)        # (n_q_pad, 2*H*Dh)
        for hh in range(num_heads):                             # static unroll
            base = 2 * head_dim * hh                            # head slab start
            q_all_ref[hh] = qk[:, base:base + head_dim].astype(q_all_ref.dtype)
            k_all_ref[hh] = qk[:n_valid,
                               base + head_dim:base + 2 * head_dim].astype(
                                   k_all_ref.dtype)

    q_start = pl.multiple_of(qt * tq, tq)
    q = q_all_ref[h, pl.ds(q_start, tq), :]                     # (tq, Dh)
    k = k_all_ref[h]                                            # (N, Dh)
    _attention_tile(q, k, out_ref, approx_recip)


def _qk_attention_kernel_per_head(x_ref, w_ref, out_ref, q_ref, k_ref, *,
                                  head_dim, n_valid, approx_recip):
    # x_ref:  (1, n_q_pad, C)
    # w_ref:  (1, C, 2*Dh)            this head's [q | k] weight slab (q pre-scaled)
    # out_ref:(1, 1, tq, N)
    # q_ref:  (n_q_pad, Dh), k_ref: (N, Dh)   per-(b, h) scratch
    qt = pl.program_id(2)
    tq = out_ref.shape[2]

    @pl.when(qt == 0)
    def _project():
        qk = jnp.dot(x_ref[0], w_ref[0],
                     preferred_element_type=jnp.float32)        # (n_q_pad, 2*Dh)
        q_ref[...] = qk[:, :head_dim].astype(q_ref.dtype)
        k_ref[...] = qk[:n_valid, head_dim:].astype(k_ref.dtype)

    q_start = pl.multiple_of(qt * tq, tq)
    q = q_ref[pl.ds(q_start, tq), :]                            # (tq, Dh)
    _attention_tile(q, k_ref[...], out_ref, approx_recip)


def qk_attention(x, w_full, *, num_heads, scale=None,
                 compute_dtype=jnp.bfloat16, out_dtype=jnp.bfloat16,
                 approx_softmax_recip=True, tq=None,
                 per_head_projection=None, vmem_limit_bytes=None):
    """x: (B, N, C); w_full: (2*dim, C) PyTorch nn.Linear weight (out, in).

    Returns attn: (B, H, N, N) in `out_dtype` (default bfloat16 — the kernel is
    writeback-bound, probabilities tolerate bf16 well).
    """
    B, N, C = x.shape
    two_dim, in_dim = w_full.shape
    assert in_dim == C, "weight in-features must match channels"
    dim = two_dim // 2
    assert dim % num_heads == 0
    head_dim = dim // num_heads
    if scale is None:
        scale = head_dim ** (-0.5)

    gen = _chip_generation()
    if per_head_projection is None:
        # v7x: 2 TensorCores + 64 MiB VMEM -> per-head projection (head axis
        # parallel, small scratch).  v5e/v6e: fused projection (better MXU
        # output-width utilization, 1 TC, 128 MiB VMEM).
        per_head_projection = (gen == "v7x")
    if vmem_limit_bytes is None:
        vmem_limit_bytes = {"v7x": 44 << 20, "big_vmem": 96 << 20}.get(gen, 32 << 20)

    # Query-tile size.  Output block is (tq, N): last dim equals the full array
    # dim (always legal), second-to-last must be a multiple of the sublane tile
    # for out_dtype unless it equals N.
    out_sublane = 16 if jnp.dtype(out_dtype).itemsize == 2 else 8
    if tq is None:
        tq = {"v7x": 256, "big_vmem": 512}.get(gen, 256)
    tq = min(int(tq), N)
    if tq < N:
        assert tq % out_sublane == 0, (
            f"tq={tq} must be a multiple of {out_sublane} for out_dtype={out_dtype}")
    num_q_tiles = pl.cdiv(N, tq)
    n_q_pad = num_q_tiles * tq      # queries padded only inside x/scratch; the
                                    # output stays (N, N) and the last tile's
                                    # out-of-bounds rows are masked at writeback.

    # Weight packing (trace-time): fold the softmax scale into the q half and
    # interleave per head as [q_0|k_0|q_1|k_1|...] so each head's slab is a
    # contiguous 2*Dh-lane block (one 128-lane tile when Dh == 64).
    w_t = jnp.asarray(w_full, dtype=jnp.float32).T               # (C, 2*dim)
    wq = (w_t[:, :dim] * scale).reshape(C, num_heads, head_dim)
    wk = w_t[:, dim:].reshape(C, num_heads, head_dim)
    w_heads = jnp.concatenate([wq, wk], axis=-1)                 # (C, H, 2*Dh)

    x_in = x
    if n_q_pad > N:
        x_in = jnp.pad(x_in, ((0, 0), (0, n_q_pad - N), (0, 0)))
    x_in = x_in.astype(compute_dtype)

    grid = (B, num_heads, num_q_tiles)
    x_spec = pl.BlockSpec((1, n_q_pad, C), lambda b, h, qt: (b, 0, 0))
    out_spec = pl.BlockSpec((1, 1, tq, N), lambda b, h, qt: (b, h, qt, 0))

    if per_head_projection:
        w_in = jnp.transpose(w_heads, (1, 0, 2)).astype(compute_dtype)   # (H, C, 2*Dh)
        w_spec = pl.BlockSpec((1, C, 2 * head_dim), lambda b, h, qt: (h, 0, 0))
        scratch = [pltpu.VMEM((n_q_pad, head_dim), compute_dtype),       # q (this head)
                   pltpu.VMEM((N, head_dim), compute_dtype)]             # k (this head)
        kernel = functools.partial(
            _qk_attention_kernel_per_head,
            head_dim=head_dim, n_valid=N, approx_recip=approx_softmax_recip)
        # Projection depends only on (b, h): both b and h can be sharded
        # across TensorCores (v7x megacore).
        semantics = ("parallel", "parallel", "arbitrary")
    else:
        w_in = w_heads.reshape(C, 2 * dim).astype(compute_dtype)         # (C, 2*H*Dh)
        w_spec = pl.BlockSpec((C, 2 * dim), lambda b, h, qt: (0, 0))
        scratch = [pltpu.VMEM((num_heads, n_q_pad, head_dim), compute_dtype),  # q_all
                   pltpu.VMEM((num_heads, N, head_dim), compute_dtype)]        # k_all
        kernel = functools.partial(
            _qk_attention_kernel_fused,
            num_heads=num_heads, head_dim=head_dim, n_valid=N,
            approx_recip=approx_softmax_recip)
        # Only B is parallel: the h/qt axes reuse the per-batch scratch
        # projections computed at (h==0, qt==0).
        semantics = ("parallel", "arbitrary", "arbitrary")

    return pl.pallas_call(
        kernel,
        out_shape=jax.ShapeDtypeStruct((B, num_heads, N, N), out_dtype),
        grid_spec=pltpu.PrefetchScalarGridSpec(
            num_scalar_prefetch=0,
            grid=grid,
            in_specs=[x_spec, w_spec],
            out_specs=out_spec,
            scratch_shapes=scratch,
        ),
        compiler_params=pltpu.CompilerParams(
            dimension_semantics=semantics,
            vmem_limit_bytes=int(vmem_limit_bytes),
        ),
    )(x_in, w_in)


def reference_qk_attention(x, w_full, *, num_heads, scale):
    """Plain-JAX reproduction of the PyTorch forward for verification."""
    B, N, C = x.shape
    dim = w_full.shape[0] // 2
    qk = x @ w_full.T                                            # (B, N, 2*dim)
    qk = qk.reshape(B, N, 2, num_heads, dim // num_heads)
    qk = jnp.transpose(qk, (2, 0, 3, 1, 4))                      # (2, B, H, N, Dh)
    q, k = qk[0], qk[1]
    attn = (q @ jnp.swapaxes(k, -2, -1)) * scale
    return jax.nn.softmax(attn, axis=-1)


if __name__ == "__main__":
    # Small shapes consistent with the module's forward.
    B, N, C = 2, 8, 32          # batch, tokens, channels (dim == input_dim == C)
    num_heads = 4
    head_dim = C // num_heads   # 8
    scale = head_dim ** (-0.5)  # qk_scale=None default

    key = jax.random.PRNGKey(0)
    kx, kw, kx2 = jax.random.split(key, 3)
    x = jax.random.normal(kx, (B, N, C), dtype=jnp.float32)
    # nn.Linear(dim, 2*dim, bias=False): weight shape (2*dim, dim).
    w_full = jax.random.normal(kw, (2 * C, C), dtype=jnp.float32) * (1.0 / jnp.sqrt(C))

    ref = reference_qk_attention(x, w_full, num_heads=num_heads, scale=scale)

    # 1) Strict f32, fused-projection path (exact reciprocal) — tight tolerance.
    a1 = qk_attention(
        x, w_full, num_heads=num_heads, scale=scale,
        compute_dtype=jnp.float32, out_dtype=jnp.float32,
        approx_softmax_recip=False, per_head_projection=False)
    a1 = jax.block_until_ready(a1)
    assert a1.shape == (B, num_heads, N, N)
    assert jnp.allclose(a1, ref, atol=2e-4, rtol=2e-4), "fused f32 mismatch"

    # 2) Strict f32, per-head-projection path (v7x-style) — tight tolerance.
    a2 = qk_attention(
        x, w_full, num_heads=num_heads, scale=scale,
        compute_dtype=jnp.float32, out_dtype=jnp.float32,
        approx_softmax_recip=False, per_head_projection=True)
    a2 = jax.block_until_ready(a2)
    assert jnp.allclose(a2, ref, atol=2e-4, rtol=2e-4), "per-head f32 mismatch"

    # 3) Default fast path: bf16 MXU operands, bf16 writeback, approx EUP recip.
    a3 = qk_attention(x, w_full, num_heads=num_heads, scale=scale)
    a3 = jax.block_until_ready(a3)
    assert a3.dtype == jnp.bfloat16
    assert jnp.allclose(a3.astype(jnp.float32), ref, atol=5e-2), "bf16 mismatch"

    # 4) Non-divisible query tiling (N % tq != 0): exercises masked out-of-bounds
    #    writeback of the last query tile and padded scratch query rows, in both
    #    projection modes.
    N2 = 24
    x2 = jax.random.normal(kx2, (B, N2, C), dtype=jnp.float32)
    ref2 = reference_qk_attention(x2, w_full, num_heads=num_heads, scale=scale)
    for mode in (False, True):
        a4 = qk_attention(
            x2, w_full, num_heads=num_heads, scale=scale,
            compute_dtype=jnp.float32, out_dtype=jnp.float32,
            approx_softmax_recip=False, tq=16, per_head_projection=mode)
        a4 = jax.block_until_ready(a4)
        assert a4.shape == (B, num_heads, N2, N2)
        assert jnp.allclose(a4, ref2, atol=2e-4, rtol=2e-4), \
            f"tiled (per_head={mode}) mismatch"

    print("KERNEL_OK")
</pallas_src>

<mosaic_0001>
module attributes {stable_mosaic.version = 11 : i64} {
  func.func @_qk_attention_kernel_fused(%arg0: i32, %arg1: i32, %arg2: i32, %arg3: memref<1x8x32xf32, #tpu.memory_space<vmem>>, %arg4: memref<32x64xf32, #tpu.memory_space<vmem>>, %arg5: memref<1x1x8x8xf32, #tpu.memory_space<vmem>>, %arg6: memref<4x8x8xf32, #tpu.memory_space<vmem>>, %arg7: memref<4x8x8xf32, #tpu.memory_space<vmem>>) attributes {dimension_semantics = [#tpu.dimension_semantics<parallel>, #tpu.dimension_semantics<arbitrary>, #tpu.dimension_semantics<arbitrary>], iteration_bounds = array<i64: 2, 4, 1>, scalar_prefetch = 0 : i64, scratch_operands = 2 : i64, tpu.core_type = #tpu.core_type<tc>, window_params = [{transform_indices = @transform_0, window_bounds = array<i64: 1, 8, 32>}, {pipeline_mode = #tpu.pipeline_mode<synchronous>, transform_indices = @transform_1, window_bounds = array<i64: 32, 64>}, {transform_indices = @transform_2, window_bounds = array<i64: 1, 1, 8, 8>}]} {
    %c0_i32 = arith.constant 0 : i32
    %0 = arith.cmpi eq, %arg1, %c0_i32 : i32
    %c0_i32_0 = arith.constant 0 : i32
    %1 = arith.cmpi eq, %arg2, %c0_i32_0 : i32
    %2 = arith.andi %0, %1 : i1
    %3 = arith.extui %2 : i1 to i32
    %c0_i32_1 = arith.constant 0 : i32
    %4 = arith.cmpi ne, %3, %c0_i32_1 : i32
    scf.if %4 {
      %c0_10 = arith.constant 0 : index
      %c0_11 = arith.constant 0 : index
      %c0_12 = arith.constant 0 : index
      %28 = vector.load %arg3[%c0_10, %c0_11, %c0_12] : memref<1x8x32xf32, #tpu.memory_space<vmem>>, vector<1x8x32xf32>
      %29 = vector.shape_cast %28 : vector<1x8x32xf32> to vector<8x32xf32>
      %c0_13 = arith.constant 0 : index
      %c0_14 = arith.constant 0 : index
      %30 = vector.load %arg4[%c0_13, %c0_14] : memref<32x64xf32, #tpu.memory_space<vmem>>, vector<32x64xf32>
      %cst_15 = arith.constant dense<0.000000e+00> : vector<8x64xf32>
      %31 = tpu.matmul %29, %30, %cst_15 {dimension_numbers = #tpu.dot_dimension_numbers<[1], [0], [0], [1], [0, 0, 1, 1], [], []>} : vector<8x32xf32>, vector<32x64xf32>, vector<8x64xf32> -> vector<8x64xf32>
      %32 = vector.extract_strided_slice %31 {offsets = [0, 0], sizes = [8, 8], strides = [1, 1]} : vector<8x64xf32> to vector<8x8xf32>
      %c0_16 = arith.constant 0 : index
      %c0_17 = arith.constant 0 : index
      %c0_18 = arith.constant 0 : index
      %33 = vector.load %arg6[%c0_16, %c0_17, %c0_18] : memref<4x8x8xf32, #tpu.memory_space<vmem>>, vector<1x8x8xf32>
      %34 = vector.shape_cast %33 : vector<1x8x8xf32> to vector<8x8xf32>
      %35 = vector.shape_cast %32 : vector<8x8xf32> to vector<1x8x8xf32>
      tpu.vector_store %arg6[%c0_16, %c0_17, %c0_18], %35 {strides = array<i32>} : memref<4x8x8xf32, #tpu.memory_space<vmem>>, vector<1x8x8xf32>,
      %36 = vector.extract_strided_slice %31 {offsets = [0, 8], sizes = [8, 8], strides = [1, 1]} : vector<8x64xf32> to vector<8x8xf32>
      %c0_19 = arith.constant 0 : index
      %c0_20 = arith.constant 0 : index
      %c0_21 = arith.constant 0 : index
      %37 = vector.load %arg7[%c0_19, %c0_20, %c0_21] : memref<4x8x8xf32, #tpu.memory_space<vmem>>, vector<1x8x8xf32>
      %38 = vector.shape_cast %37 : vector<1x8x8xf32> to vector<8x8xf32>
      %39 = vector.shape_cast %36 : vector<8x8xf32> to vector<1x8x8xf32>
      tpu.vector_store %arg7[%c0_19, %c0_20, %c0_21], %39 {strides = array<i32>} : memref<4x8x8xf32, #tpu.memory_space<vmem>>, vector<1x8x8xf32>,
      %40 = vector.extract_strided_slice %31 {offsets = [0, 16], sizes = [8, 8], strides = [1, 1]} : vector<8x64xf32> to vector<8x8xf32>
      %c1 = arith.constant 1 : index
      %c0_22 = arith.constant 0 : index
      %c0_23 = arith.constant 0 : index
      %41 = vector.load %arg6[%c1, %c0_22, %c0_23] : memref<4x8x8xf32, #tpu.memory_space<vmem>>, vector<1x8x8xf32>
      %42 = vector.shape_cast %41 : vector<1x8x8xf32> to vector<8x8xf32>
      %43 = vector.shape_cast %40 : vector<8x8xf32> to vector<1x8x8xf32>
      tpu.vector_store %arg6[%c1, %c0_22, %c0_23], %43 {strides = array<i32>} : memref<4x8x8xf32, #tpu.memory_space<vmem>>, vector<1x8x8xf32>,
      %44 = vector.extract_strided_slice %31 {offsets = [0, 24], sizes = [8, 8], strides = [1, 1]} : vector<8x64xf32> to vector<8x8xf32>
      %c1_24 = arith.constant 1 : index
      %c0_25 = arith.constant 0 : index
      %c0_26 = arith.constant 0 : index
      %45 = vector.load %arg7[%c1_24, %c0_25, %c0_26] : memref<4x8x8xf32, #tpu.memory_space<vmem>>, vector<1x8x8xf32>
      %46 = vector.shape_cast %45 : vector<1x8x8xf32> to vector<8x8xf32>
      %47 = vector.shape_cast %44 : vector<8x8xf32> to vector<1x8x8xf32>
      tpu.vector_store %arg7[%c1_24, %c0_25, %c0_26], %47 {strides = array<i32>} : memref<4x8x8xf32, #tpu.memory_space<vmem>>, vector<1x8x8xf32>,
      %48 = vector.extract_strided_slice %31 {offsets = [0, 32], sizes = [8, 8], strides = [1, 1]} : vector<8x64xf32> to vector<8x8xf32>
      %c2 = arith.constant 2 : index
      %c0_27 = arith.constant 0 : index
      %c0_28 = arith.constant 0 : index
      %49 = vector.load %arg6[%c2, %c0_27, %c0_28] : memref<4x8x8xf32, #tpu.memory_space<vmem>>, vector<1x8x8xf32>
      %50 = vector.shape_cast %49 : vector<1x8x8xf32> to vector<8x8xf32>
      %51 = vector.shape_cast %48 : vector<8x8xf32> to vector<1x8x8xf32>
      tpu.vector_store %arg6[%c2, %c0_27, %c0_28], %51 {strides = array<i32>} : memref<4x8x8xf32, #tpu.memory_space<vmem>>, vector<1x8x8xf32>,
      %52 = vector.extract_strided_slice %31 {offsets = [0, 40], sizes = [8, 8], strides = [1, 1]} : vector<8x64xf32> to vector<8x8xf32>
      %c2_29 = arith.constant 2 : index
      %c0_30 = arith.constant 0 : index
      %c0_31 = arith.constant 0 : index
      %53 = vector.load %arg7[%c2_29, %c0_30, %c0_31] : memref<4x8x8xf32, #tpu.memory_space<vmem>>, vector<1x8x8xf32>
      %54 = vector.shape_cast %53 : vector<1x8x8xf32> to vector<8x8xf32>
      %55 = vector.shape_cast %52 : vector<8x8xf32> to vector<1x8x8xf32>
      tpu.vector_store %arg7[%c2_29, %c0_30, %c0_31], %55 {strides = array<i32>} : memref<4x8x8xf32, #tpu.memory_space<vmem>>, vector<1x8x8xf32>,
      %56 = vector.extract_strided_slice %31 {offsets = [0, 48], sizes = [8, 8], strides = [1, 1]} : vector<8x64xf32> to vector<8x8xf32>
      %c3 = arith.constant 3 : index
      %c0_32 = arith.constant 0 : index
      %c0_33 = arith.constant 0 : index
      %57 = vector.load %arg6[%c3, %c0_32, %c0_33] : memref<4x8x8xf32, #tpu.memory_space<vmem>>, vector<1x8x8xf32>
      %58 = vector.shape_cast %57 : vector<1x8x8xf32> to vector<8x8xf32>
      %59 = vector.shape_cast %56 : vector<8x8xf32> to vector<1x8x8xf32>
      tpu.vector_store %arg6[%c3, %c0_32, %c0_33], %59 {strides = array<i32>} : memref<4x8x8xf32, #tpu.memory_space<vmem>>, vector<1x8x8xf32>,
      %60 = vector.extract_strided_slice %31 {offsets = [0, 56], sizes = [8, 8], strides = [1, 1]} : vector<8x64xf32> to vector<8x8xf32>
      %c3_34 = arith.constant 3 : index
      %c0_35 = arith.constant 0 : index
      %c0_36 = arith.constant 0 : index
      %61 = vector.load %arg7[%c3_34, %c0_35, %c0_36] : memref<4x8x8xf32, #tpu.memory_space<vmem>>, vector<1x8x8xf32>
      %62 = vector.shape_cast %61 : vector<1x8x8xf32> to vector<8x8xf32>
      %63 = vector.shape_cast %60 : vector<8x8xf32> to vector<1x8x8xf32>
      tpu.vector_store %arg7[%c3_34, %c0_35, %c0_36], %63 {strides = array<i32>} : memref<4x8x8xf32, #tpu.memory_space<vmem>>, vector<1x8x8xf32>,
    } else {
    }
    %c8_i32 = arith.constant 8 : i32
    %5 = arith.muli %arg2, %c8_i32 : i32
    %6 = tpu.assume_multiple %5, 8 : i32
    %7 = arith.index_cast %arg1 : i32 to index
    %8 = arith.index_cast %6 : i32 to index
    %c0 = arith.constant 0 : index
    %9 = vector.load %arg6[%7, %8, %c0] : memref<4x8x8xf32, #tpu.memory_space<vmem>>, vector<1x8x8xf32>
    %10 = vector.shape_cast %9 : vector<1x8x8xf32> to vector<8x8xf32>
    %11 = arith.index_cast %arg1 : i32 to index
    %c0_2 = arith.constant 0 : index
    %c0_3 = arith.constant 0 : index
    %12 = vector.load %arg7[%11, %c0_2, %c0_3] : memref<4x8x8xf32, #tpu.memory_space<vmem>>, vector<1x8x8xf32>
    %13 = vector.shape_cast %12 : vector<1x8x8xf32> to vector<8x8xf32>
    %cst = arith.constant dense<0.000000e+00> : vector<8x8xf32>
    %14 = tpu.matmul %10, %13, %cst {dimension_numbers = #tpu.dot_dimension_numbers<[1], [1], [0], [0], [0, 0, 1, 0], [], []>} : vector<8x8xf32>, vector<8x8xf32>, vector<8x8xf32> -> vector<8x8xf32>
    %cst_4 = arith.constant dense<0xFF800000> : vector<8xf32>
    %15 = vector.multi_reduction <maximumf>, %14, %cst_4 [1] : vector<8x8xf32> to vector<8xf32>
    %16 = vector.shape_cast %15 : vector<8xf32> to vector<8x1xf32>
    %17 = vector.broadcast %16 : vector<8x1xf32> to vector<8x8xf32>
    %18 = arith.subf %14, %17 : vector<8x8xf32>
    %19 = math.exp %18 : vector<8x8xf32>
    %cst_5 = arith.constant dense<0.000000e+00> : vector<8xf32>
    %20 = vector.multi_reduction <add>, %19, %cst_5 [1] : vector<8x8xf32> to vector<8xf32>
    %21 = vector.shape_cast %20 : vector<8xf32> to vector<8x1xf32>
    %22 = tpu.reciprocal %21 : vector<8x1xf32> -> vector<8x1xf32>
    %23 = vector.broadcast %22 : vector<8x1xf32> to vector<8x8xf32>
    %24 = arith.mulf %19, %23 : vector<8x8xf32>
    %c0_6 = arith.constant 0 : index
    %c0_7 = arith.constant 0 : index
    %c0_8 = arith.constant 0 : index
    %c0_9 = arith.constant 0 : index
    %25 = vector.load %arg5[%c0_6, %c0_7, %c0_8, %c0_9] : memref<1x1x8x8xf32, #tpu.memory_space<vmem>>, vector<1x1x8x8xf32>
    %26 = vector.shape_cast %25 : vector<1x1x8x8xf32> to vector<8x8xf32>
    %27 = vector.shape_cast %24 : vector<8x8xf32> to vector<1x1x8x8xf32>
    tpu.vector_store %arg5[%c0_6, %c0_7, %c0_8, %c0_9], %27 {strides = array<i32>} : memref<1x1x8x8xf32, #tpu.memory_space<vmem>>, vector<1x1x8x8xf32>,
    return
  }
  func.func @transform_0(%arg0: i32, %arg1: i32, %arg2: i32) -> (i32, i32, i32) {
    %c0_i32 = arith.constant 0 : i32
    %c0_i32_0 = arith.constant 0 : i32
    %c0_i32_1 = arith.constant 0 : i32
    return %arg0, %c0_i32, %c0_i32_0 : i32, i32, i32
  }
  func.func @transform_1(%arg0: i32, %arg1: i32, %arg2: i32) -> (i32, i32) {
    %c0_i32 = arith.constant 0 : i32
    %c0_i32_0 = arith.constant 0 : i32
    %c0_i32_1 = arith.constant 0 : i32
    return %c0_i32, %c0_i32_0 : i32, i32
  }
  func.func @transform_2(%arg0: i32, %arg1: i32, %arg2: i32) -> (i32, i32, i32, i32) {
    %c0_i32 = arith.constant 0 : i32
    %c0_i32_0 = arith.constant 0 : i32
    return %arg0, %arg1, %arg2, %c0_i32 : i32, i32, i32, i32
  }
}

</mosaic_0001>

<llo_original>
// kernel: tpu_custom_call.1
$region0: #{tpu_custom_call.1}
  #allocation0 [shape = 'u32[]', space=smem, size = 0x4, offset = 0x4, fixed_abs, tag = 'smem constant byte address 0x4 - core index']
  #allocation1 [shape = 'u32[144,128]{1,0:T(1,128)}', space=vmem, size = 0x12000, scoped, tag = 'internal scratch']
  #allocation2 [shape = 'f32[4,8,8]{2,1,0:T(8,128)}', space=vmem, size = 0x4000, scoped, tag = 'scratch operand']
  #allocation3 [shape = 'f32[4,8,8]{2,1,0:T(8,128)}', space=vmem, size = 0x4000, scoped, tag = 'scratch operand']
  %s0 = inlined_call_operand.hbm [shape: f32[2,8,32], index: 0, kind: input, shape index: {}]
  %s1 = inlined_call_operand.hbm [shape: f32[32,64], index: 1, kind: input, shape index: {}]
  %s2 = inlined_call_operand.hbm [shape: f32[2,4,8,8], index: 2, kind: output, shape index: {}]
  %s3 = sld [smem:[#allocation0]]
  $region53: #{tpu_custom_call.1} parent=0
    _
  %s5 = ssub.s32 1, %s3
  %s6 = scalar_select 0, %s5, %s3
  $region1: #{tpu_custom_call.1} parent=0
    #allocation4 [shape = 'u8[8192]{0}', space=vmem, size = 0x2000, scoped, tag = 'input window, operand 0']
    #allocation5 [shape = 's32[2]{0}', space=sflag, size = 0x8, scoped, tag = 'scoped memory for tpu_custom_call.1']
    #allocation6 [shape = 's32[2]{0}', space=sflag, size = 0x8, scoped, tag = 'scoped memory for tpu_custom_call.1']
    #allocation7 [shape = 'u8[16384]{0}', space=vmem, size = 0x4000, scoped, tag = 'input window, operand 1, single buffered']
    #allocation8 [shape = 's32[1]{0}', space=sflag, size = 0x4, scoped, tag = 'scoped memory for tpu_custom_call.1']
    #allocation9 [shape = 'u8[8192]{0}', space=vmem, size = 0x2000, scoped, tag = 'output window, operand 0']
    %7 = vsyncpa [#allocation5], 0
    %s8 = scalar_lea.sflag [#allocation5], 1
    %9 = vsyncpa %s8, 0
    %10 = vsyncpa [#allocation8], 0
    %11 = vsyncpa [#allocation6], 0
    %s12 = scalar_lea.sflag [#allocation6], 1
    %13 = vsyncpa %s12, 0
    loop: start=0, step=1, limit=10
    $region2: #{tpu_custom_call.1} parent=1 // loop_pre_header
      _
    $region3: #{tpu_custom_call.1} parent=1 // loop_header
      %s15 = sphi 0, %s19
      %p16 = scmp.ge.s32.totalorder %s15, 10
      %s22 = sphi 0, %s41
      %s23 = sphi 0, %s37
      %s24 = sphi 0, %s33
      %s25 = sphi 0, %s22
      %s26 = sphi 0, %s23
      %s27 = sphi 0, %s24
      %s28 = sphi 0, %s25
      %s29 = sphi 0, %s26
      %s30 = sphi 0, %s27
      %s44 = sphi 0, %s46
      %s47 = sphi 0, %s44
      %s48 = sphi 0, %s47
      %s64 = sphi 0, %s48
      %s68 = sphi 0, %s68
      %s70 = sphi 0, %s68
      %s71 = sphi 0, %s70
      %s85 = sphi 0, %s71
      %s95 = sphi 0, %s97
      %s98 = sphi 0, %s95
      %s99 = sphi 0, %s98
      %s115 = sphi 0, %s99
    $region4: #{tpu_custom_call.1} parent=1 // loop_header_branch
      %18 = sbr.rel (%p16) target = $region8
    $region5: #{tpu_custom_call.1} parent=1 // loop_body
      %s20 = ssub.s32 %s15, 1
      %s21 = ssub.s32 %s15, 2
      %s31 = sadd.s32 1, %s24
      %p32 = scmp.ge.s32.totalorder %s31, 1
      %s33 = scalar_select %p32, 0, %s31
      %s34 = sadd.s32 1, %s23
      %s35 = scalar_select %p32, %s34, %s23
      %p36 = scmp.ge.s32.totalorder %s35, 4
      %s37 = scalar_select %p36, 0, %s35
      %s38 = sadd.s32 1, %s22
      %s39 = scalar_select %p36, %s38, %s22
      %p40 = scmp.ge.s32.totalorder %s39, 2
      %s41 = scalar_select %p40, 0, %s39
      %s42 = ssub.s32 %s22, %s41
      %p43 = scmp.eq.s32.totalorder %s42, 0
      %s45 = sadd.s32 %s44, 1
      %s46 = scalar_select %p43, %s44, %s45
      %p49 = pneg %p43
      %p50 = scmp.eq.s32.totalorder %s15, 7
      %p51 = por %p49, %p50
      %p52 = scmp.ne.s32.totalorder %s44, %s47
      %p53 = scmp.eq.s32.totalorder %s15, 0
      %p54 = por %p52, %p53
      %p55 = scmp.ne.s32.totalorder %s44, %s47
      %p56 = scmp.eq.s32.totalorder %s20, 7
      %p57 = por %p55, %p56
      %p58 = scmp.ne.s32.totalorder %s47, %s48
      %p59 = scmp.eq.s32.totalorder %s20, 0
      %p60 = por %p58, %p59
      %p61 = scmp.ne.s32.totalorder %s47, %s48
      %p62 = scmp.eq.s32.totalorder %s21, 7
      %p63 = por %p61, %p62
      %p65 = scmp.ne.s32.totalorder %s48, %s64
      %p66 = scmp.eq.s32.totalorder %s21, 0
      %p67 = por %p65, %p66
      %s69 = sadd.s32 %s68, 1
      %p72 = scmp.eq.s32.totalorder %s15, 7
      %p73 = scmp.ne.s32.totalorder %s68, %s70
      %p74 = scmp.eq.s32.totalorder %s15, 0
      %p75 = por %p73, %p74
      %p76 = scmp.ne.s32.totalorder %s68, %s70
      %p77 = scmp.eq.s32.totalorder %s20, 7
      %p78 = por %p76, %p77
      %p79 = scmp.ne.s32.totalorder %s70, %s71
      %p80 = scmp.eq.s32.totalorder %s20, 0
      %p81 = por %p79, %p80
      %p82 = scmp.ne.s32.totalorder %s70, %s71
      %p83 = scmp.eq.s32.totalorder %s21, 7
      %p84 = por %p82, %p83
      %p86 = scmp.ne.s32.totalorder %s71, %s85
      %p87 = scmp.eq.s32.totalorder %s21, 0
      %p88 = por %p86, %p87
      %s89 = ssub.s32 %s22, %s41
      %s90 = ssub.s32 %s23, %s37
      %s91 = sor.u32 %s89, %s90
      %s92 = ssub.s32 %s24, %s33
      %s93 = sor.u32 %s91, %s92
      %p94 = scmp.eq.s32.totalorder %s93, 0
      %s96 = sadd.s32 %s95, 1
      %s97 = scalar_select %p94, %s95, %s96
      %p100 = pneg %p94
      %p101 = scmp.eq.s32.totalorder %s15, 7
      %p102 = por %p100, %p101
      %p103 = scmp.ne.s32.totalorder %s95, %s98
      %p104 = scmp.eq.s32.totalorder %s15, 0
      %p105 = por %p103, %p104
      %p106 = scmp.ne.s32.totalorder %s95, %s98
      %p107 = scmp.eq.s32.totalorder %s20, 7
      %p108 = por %p106, %p107
      %p109 = scmp.ne.s32.totalorder %s98, %s99
      %p110 = scmp.eq.s32.totalorder %s20, 0
      %p111 = por %p109, %p110
      %p112 = scmp.ne.s32.totalorder %s98, %s99
      %p113 = scmp.eq.s32.totalorder %s21, 7
      %p114 = por %p112, %p113
      %p116 = scmp.ne.s32.totalorder %s99, %s115
      %p117 = scmp.eq.s32.totalorder %s21, 0
      %p118 = por %p116, %p117
      %p119 = scmp.le.s32.totalorder 1, %s15
      %p120 = scmp.lt.s32.totalorder %s15, 9
      %p121 = pnand %p119, %p120
      %p122 = pneg %p121
      // Predicated region
      $region9: #{tpu_custom_call.1} parent=5 // pred_check
        _
      $region10: #{tpu_custom_call.1} parent=5 // pred_check_branch
        %124 = sbr.rel (%p121) target = $region12
      $region11: #{tpu_custom_call.1} parent=5 // pred_region
        %s125 = ssub.s32 %s15, 1
        // Predicated region
        $region13: #{tpu_custom_call.1} parent=11 // pred_check
          %p126 = pneg %p81
        $region14: #{tpu_custom_call.1} parent=11 // pred_check_branch
          %128 = sbr.rel (%p126) target = $region16
        $region15: #{tpu_custom_call.1} parent=11 // pred_region
          %s130 = ssub.s32 512, 512
          %131 = vsyncadd [#allocation8], %s130
          %s132 = sshll.u32 [#allocation7], 4
          %s133 = int_to_ptr.vmem [resolvable:$true] %s132
          %138 = dma.hbm_to_vmem [thread:$0]  %s1, 512, %s133, [#allocation8], 128, 128, 8
        $region16: #{tpu_custom_call.1} parent=11 // pred_fallthru
          _
      $region12: #{tpu_custom_call.1} parent=5 // pred_fallthru
        _
      %p139 = scmp.lt.s32.totalorder %s15, 8
      // Predicated region
      $region17: #{tpu_custom_call.1} parent=5 // pred_check
        %p140 = pneg %p139
      $region18: #{tpu_custom_call.1} parent=5 // pred_check_branch
        %142 = sbr.rel (%p140) target = $region20
      $region19: #{tpu_custom_call.1} parent=5 // pred_region
        // Predicated region
        $region21: #{tpu_custom_call.1} parent=19 // pred_check
          %p143 = pneg %p54
        $region22: #{tpu_custom_call.1} parent=19 // pred_check_branch
          %145 = sbr.rel (%p143) target = $region24
        $region23: #{tpu_custom_call.1} parent=19 // pred_region
          %s146 = sand.u32 %s44, 1
          %s147 = scalar_lea.sflag [#allocation5], %s146
          %s148 = sand.u32 %s44, 1
          %s149 = smul.addr %s148, 8
          %s150 = scalar_lea.vmem [#allocation4], %s149
          %s152 = ssub.s32 128, 128
          %153 = vsyncadd %s147, %s152
          %s154 = smul.addr %s22, 128
          %s155 = scalar_lea.hbm %s0, %s154
          %s157 = sshll.u32 %s150, 4
          %s158 = int_to_ptr.vmem [resolvable:$true] %s157
          %160 = dma.hbm_to_vmem [thread:$0]  %s155, 128, %s158, %s147
        $region24: #{tpu_custom_call.1} parent=19 // pred_fallthru
          _
      $region20: #{tpu_custom_call.1} parent=5 // pred_fallthru
        _
      %p161 = scmp.le.s32.totalorder 1, %s15
      %p162 = scmp.lt.s32.totalorder %s15, 9
      %p163 = pnand %p161, %p162
      %p164 = pneg %p163
      // Predicated region
      $region25: #{tpu_custom_call.1} parent=5 // pred_check
        _
      $region26: #{tpu_custom_call.1} parent=5 // pred_check_branch
        %166 = sbr.rel (%p163) target = $region28
      $region27: #{tpu_custom_call.1} parent=5 // pred_region
        %s167 = ssub.s32 %s15, 1
        %s168 = sand.u32 %s47, 1
        %s169 = scalar_lea.sflag [#allocation5], %s168
        %s170 = sand.u32 %s47, 1
        %s171 = smul.addr %s170, 8
        %s172 = scalar_lea.vmem [#allocation4], %s171
        // Predicated region
        $region29: #{tpu_custom_call.1} parent=27 // pred_check
          %p173 = pneg %p60
        $region30: #{tpu_custom_call.1} parent=27 // pred_check_branch
          %175 = sbr.rel (%p173) target = $region32
        $region31: #{tpu_custom_call.1} parent=27 // pred_region
          %176 = dma.done %s169, 128
        $region32: #{tpu_custom_call.1} parent=27 // pred_fallthru
          _
        // Predicated region
        $region33: #{tpu_custom_call.1} parent=27 // pred_check
          %p177 = pneg %p81
        $region34: #{tpu_custom_call.1} parent=27 // pred_check_branch
          %179 = sbr.rel (%p177) target = $region36
        $region35: #{tpu_custom_call.1} parent=27 // pred_region
          %180 = dma.done [#allocation8], 512
        $region36: #{tpu_custom_call.1} parent=27 // pred_fallthru
          _
        %s181 = sand.u32 %s47, 1
        %s182 = scalar_lea.sflag [#allocation5], %s181
        %s183 = sand.u32 %s47, 1
        %s184 = smul.addr %s183, 8
        %s185 = scalar_lea.vmem [#allocation4], %s184
        %p186 = pneg %p60
        %p187 = pneg %p57
        %p188 = pneg %p81
        %p189 = pneg %p78
        %p190 = pneg %p111
        %p191 = pneg %p108
        %s192 = sand.u32 %s98, 1
        %s193 = scalar_lea.sflag [#allocation6], %s192
        %s194 = sand.u32 %s98, 1
        %s195 = smul.addr %s194, 8
        %s196 = scalar_lea.vmem [#allocation9], %s195
        %p197 = scmp.eq.s32.totalorder %s26, 0
        %p198 = scmp.eq.s32.totalorder %s27, 0
        %p199 = pnand %p197, %p198
        %p200 = pneg %p199
        // Predicated region
        $region37: #{tpu_custom_call.1} parent=27 // pred_check
          _
        $region38: #{tpu_custom_call.1} parent=27 // pred_check_branch
          %202 = sbr.rel (%p199) target = $region40
        $region39: #{tpu_custom_call.1} parent=27 // pred_region
          %v203 = vld [vmem:[%s172] sm:$0xff]
          %v204 = vld [vmem:[#allocation7] sm:$0xff]
          %v205 = vld [vmem:[#allocation7 + $0x8] sm:$0xff]
          %v206 = vld [vmem:[#allocation7 + $0x10] sm:$0xff]
          %v207 = vld [vmem:[#allocation7 + $0x18] sm:$0xff]
          %vm208 = vcmask 261120
          %v210 = vsel %vm208, %v203, 0
          %212 = vmatprep.subr.mxu0 0.0
          %213 = vmatpush1.msra.mxu0 %v204
          %214 = vmatprep.subr.mxu0 0.0
          %215 = vmatpush1.msra.mxu0 %v205
          %216 = vmatprep.subr.mxu0 0.0
          %217 = vmatpush1.msra.mxu0 %v206
          %218 = vmatprep.subr.mxu0 0.0
          %219 = vmatpush1.msra.mxu0 %v207
          %220 = vmatprep.subr.mxu0 0.0
          %221 = vmatpush1.msra.mxu0 0.0
          %222 = vmatprep.subr.mxu0 0.0
          %223 = vmatpush1.msra.mxu0 0.0
          %224 = vmatprep.subr.mxu0 0.0
          %225 = vmatpush1.msra.mxu0 0.0
          %226 = vmatprep.subr.mxu0 0.0
          %227 = vmatpush1.msra.mxu0 0.0
          %228 = vmatprep.subr.mxu0 0.0
          %229 = vmatpush1.msra.mxu0 0.0
          %230 = vmatprep.subr.mxu0 0.0
          %231 = vmatpush1.msra.mxu0 0.0
          %232 = vmatprep.subr.mxu0 0.0
          %233 = vmatpush1.msra.mxu0 0.0
          %234 = vmatprep.subr.mxu0 0.0
          %235 = vmatpush1.msra.mxu0 0.0
          %236 = vmatprep.subr.mxu0 0.0
          %237 = vmatpush1.msra.mxu0 0.0
          %238 = vmatprep.subr.mxu0 0.0
          %239 = vmatpush1.msra.mxu0 0.0
          %240 = vmatprep.subr.mxu0 0.0
          %241 = vmatpush1.msra.mxu0 0.0
          %242 = vmatprep.subr.mxu0 0.0
          %243 = vmatpush1.msra.mxu0 0.0
          %244 = vmatprep.subr.mxu0 0.0
          %245 = vmatpush1.msra.mxu0 0.0
          %246 = vmatprep.subr.mxu0 0.0
          %247 = vmatpush1.msra.mxu0 0.0
          %248 = vmatprep.subr.mxu0 0.0
          %249 = vmatpush1.msra.mxu0 0.0
          %250 = vmatprep.subr.mxu0 0.0
          %251 = vmatpush1.msra.mxu0 0.0
          %252 = vmatprep.subr.mxu0 0.0
          %253 = vmatpush1.msra.mxu0 0.0
          %254 = vmatprep.subr.mxu0 0.0
          %255 = vmatpush1.msra.mxu0 0.0
          %256 = vmatprep.subr.mxu0 0.0
          %257 = vmatpush1.msra.mxu0 0.0
          %258 = vmatprep.subr.mxu0 0.0
          %259 = vmatpush1.msra.mxu0 0.0
          %260 = vmatprep.subr.mxu0 0.0
          %261 = vmatpush1.msra.mxu0 0.0
          %262 = vmatprep.subr.mxu0 0.0
          %263 = vmatpush1.msra.mxu0 0.0
          %264 = vmatprep.subr.mxu0 0.0
          %265 = vmatpush1.msra.mxu0 0.0
          %266 = vmatprep.subr.mxu0 0.0
          %267 = vmatpush1.msra.mxu0 0.0
          %268 = vmatprep.subr.mxu0 0.0
          %269 = vmatpush1.msra.mxu0 0.0
          %270 = vmatprep.subr.mxu0 0.0
          %271 = vmatpush1.msra.mxu0 0.0
          %272 = vmatprep.subr.mxu0 0.0
          %273 = vmatpush1.msra.mxu0 0.0
          %274 = vmatprep.subr.mxu0 0.0
          %275 = vmatpush1.msra.mxu0 0.0
          %276 = vmatprep.mubr.f32.mxu0 0.0
          %277 = vmatmul.mubr.f32.gmra.mrb[0].mxu0 %v210
          %v278 = vpop.f32.mrb[0].mxu0
          %v279 = vadd.f32 0.0, %v278
          %v280 = vpop.f32.mrb[0].mxu0
          %281 = vdwg.mxu0
          %vm282 = vcmask 64512
          %283 = vst.msk [vmem:[#allocation2] sm:$0xff] %vm282, %v279
          %285 = vrot.lane.b32.xlu0 %v279, 120
          %v286 = vpop.permute.xlu0 %285
          %288 = vst.msk [vmem:[#allocation3] sm:$0xff] %vm282, %v286
          %289 = vrot.lane.b32.xlu0 %v279, 112
          %v290 = vpop.permute.xlu0 %289
          %s292 = scalar_lea.vmem [#allocation2], 8
          %293 = vst.msk [vmem:[%s292] sm:$0xff] %vm282, %v290
          %294 = vrot.lane.b32.xlu0 %v279, 104
          %v295 = vpop.permute.xlu0 %294
          %s297 = scalar_lea.vmem [#allocation3], 8
          %298 = vst.msk [vmem:[%s297] sm:$0xff] %vm282, %v295
          %299 = vrot.lane.b32.xlu0 %v279, 96
          %v300 = vpop.permute.xlu0 %299
          %s302 = scalar_lea.vmem [#allocation2], 16
          %303 = vst.msk [vmem:[%s302] sm:$0xff] %vm282, %v300
          %304 = vrot.lane.b32.xlu0 %v279, 88
          %v305 = vpop.permute.xlu0 %304
          %s307 = scalar_lea.vmem [#allocation3], 16
          %308 = vst.msk [vmem:[%s307] sm:$0xff] %vm282, %v305
          %309 = vrot.lane.b32.xlu0 %v279, 80
          %v310 = vpop.permute.xlu0 %309
          %s312 = scalar_lea.vmem [#allocation2], 24
          %313 = vst.msk [vmem:[%s312] sm:$0xff] %vm282, %v310
          %314 = vrot.lane.b32.xlu0 %v279, 72
          %v315 = vpop.permute.xlu0 %314
          %s317 = scalar_lea.vmem [#allocation3], 24
          %318 = vst.msk [vmem:[%s317] sm:$0xff] %vm282, %v315
        $region40: #{tpu_custom_call.1} parent=27 // pred_fallthru
          _
        %s319 = smul.u32 %s27, 8
        %s320 = smul.u32 %s26, 8
        %s321 = sadd.s32 %s319, %s320
        %s322 = scalar_lea.vmem [#allocation2], %s321
        %v323 = vld [vmem:[%s322] sm:$0xff]
        %s324 = scalar_lea.vmem [#allocation3], %s320
        %v325 = vld [vmem:[%s324] sm:$0xff]
        %vm326 = vcmask 64512
        %v328 = vsel %vm326, %v323, 0
        %v331 = vsel %vm326, %v325, 0
        %333 = vmatprep.subr.mxu0 0.0
        %334 = vmatpush1.xpose.msra.mxu0 %v331
        %335 = vmatprep.subr.mxu0 0.0
        %336 = vmatpush1.xpose.msra.mxu0 0.0
        %337 = vmatprep.subr.mxu0 0.0
        %338 = vmatpush1.xpose.msra.mxu0 0.0
        %339 = vmatprep.subr.mxu0 0.0
        %340 = vmatpush1.xpose.msra.mxu0 0.0
        %341 = vmatprep.subr.mxu0 0.0
        %342 = vmatpush1.xpose.msra.mxu0 0.0
        %343 = vmatprep.subr.mxu0 0.0
        %344 = vmatpush1.xpose.msra.mxu0 0.0
        %345 = vmatprep.subr.mxu0 0.0
        %346 = vmatpush1.xpose.msra.mxu0 0.0
        %347 = vmatprep.subr.mxu0 0.0
        %348 = vmatpush1.xpose.msra.mxu0 0.0
        %349 = vmatprep.subr.mxu0 0.0
        %350 = vmatpush1.xpose.msra.mxu0 0.0
        %351 = vmatprep.subr.mxu0 0.0
        %352 = vmatpush1.xpose.msra.mxu0 0.0
        %353 = vmatprep.subr.mxu0 0.0
        %354 = vmatpush1.xpose.msra.mxu0 0.0
        %355 = vmatprep.subr.mxu0 0.0
        %356 = vmatpush1.xpose.msra.mxu0 0.0
        %357 = vmatprep.subr.mxu0 0.0
        %358 = vmatpush1.xpose.msra.mxu0 0.0
        %359 = vmatprep.subr.mxu0 0.0
        %360 = vmatpush1.xpose.msra.mxu0 0.0
        %361 = vmatprep.subr.mxu0 0.0
        %362 = vmatpush1.xpose.msra.mxu0 0.0
        %363 = vmatprep.subr.mxu0 0.0
        %364 = vmatpush1.xpose.msra.mxu0 0.0
        %365 = vmatprep.subr.mxu0 0.0
        %366 = vmatpush1.xpose.msra.mxu0 0.0
        %367 = vmatprep.subr.mxu0 0.0
        %368 = vmatpush1.xpose.msra.mxu0 0.0
        %369 = vmatprep.subr.mxu0 0.0
        %370 = vmatpush1.xpose.msra.mxu0 0.0
        %371 = vmatprep.subr.mxu0 0.0
        %372 = vmatpush1.xpose.msra.mxu0 0.0
        %373 = vmatprep.subr.mxu0 0.0
        %374 = vmatpush1.xpose.msra.mxu0 0.0
        %375 = vmatprep.subr.mxu0 0.0
        %376 = vmatpush1.xpose.msra.mxu0 0.0
        %377 = vmatprep.subr.mxu0 0.0
        %378 = vmatpush1.xpose.msra.mxu0 0.0
        %379 = vmatprep.subr.mxu0 0.0
        %380 = vmatpush1.xpose.msra.mxu0 0.0
        %381 = vmatprep.subr.mxu0 0.0
        %382 = vmatpush1.xpose.msra.mxu0 0.0
        %383 = vmatprep.subr.mxu0 0.0
        %384 = vmatpush1.xpose.msra.mxu0 0.0
        %385 = vmatprep.subr.mxu0 0.0
        %386 = vmatpush1.xpose.msra.mxu0 0.0
        %387 = vmatprep.subr.mxu0 0.0
        %388 = vmatpush1.xpose.msra.mxu0 0.0
        %389 = vmatprep.subr.mxu0 0.0
        %390 = vmatpush1.xpose.msra.mxu0 0.0
        %391 = vmatprep.subr.mxu0 0.0
        %392 = vmatpush1.xpose.msra.mxu0 0.0
        %393 = vmatprep.subr.mxu0 0.0
        %394 = vmatpush1.xpose.msra.mxu0 0.0
        %395 = vmatprep.subr.mxu0 0.0
        %396 = vmatpush1.xpose.msra.mxu0 0.0
        %397 = vmatprep.mubr.f32.mxu0 0.0
        %398 = vmatmul.mubr.f32.gmra.mrb[0].mxu0 %v328
        %v399 = vpop.f32.mrb[0].mxu0
        %v400 = vadd.f32 0.0, %v399
        %v401 = vpop.f32.mrb[0].mxu0
        %402 = vdwg.mxu0
        %v403 = vsel %vm326, %v400, -inf
        %404 = vmax.xlane.f32.xlu0 %v403
        %v405 = vpop.xlane.xlu0 %404
        %v406 = vsub.f32 %v400, %v405
        %v407 = vmul.f32 %v406, 1.442695
        %v408 = vpow.pop %v407
        %v409 = vsel %vm326, %v408, 0.0
        %410 = vadd.xlane.f32.xlu0 %v409
        %v411 = vpop.xlane.xlu0 %410
        %v412 = vrcp.pop %v411
        %v413 = vmul.f32 %v408, %v412
        %414 = vst.msk [vmem:[%s196] sm:$0xff] %vm326, %v413
        %s415 = sand.u32 %s98, 1
        %s416 = scalar_lea.sflag [#allocation6], %s415
        %s417 = sand.u32 %s98, 1
        %s418 = smul.addr %s417, 8
        %s419 = scalar_lea.vmem [#allocation9], %s418
        // Predicated region
        $region41: #{tpu_custom_call.1} parent=27 // pred_check
          %p420 = pneg %p108
        $region42: #{tpu_custom_call.1} parent=27 // pred_check_branch
          %422 = sbr.rel (%p420) target = $region44
        $region43: #{tpu_custom_call.1} parent=27 // pred_region
          %s424 = ssub.s32 128, 128
          %425 = vsyncadd %s416, %s424
          %s426 = sadd.s32 %s27, %s26
          %s427 = smul.addr %s25, 4
          %s428 = sadd.s32 %s426, %s427
          %s429 = smul.addr %s428, 128
          %s430 = scalar_lea.hbm %s2, %s429
          %s432 = sshll.u32 %s419, 4
          %s433 = int_to_ptr.vmem [resolvable:$true] %s432
          %435 = dma.vmem_to_hbm [thread:$0]  %s433, 128, %s430, %s416
        $region44: #{tpu_custom_call.1} parent=27 // pred_fallthru
          _
      $region28: #{tpu_custom_call.1} parent=5 // pred_fallthru
        _
      %p436 = scmp.le.s32.totalorder 2, %s15
      // Predicated region
      $region45: #{tpu_custom_call.1} parent=5 // pred_check
        %p437 = pneg %p436
      $region46: #{tpu_custom_call.1} parent=5 // pred_check_branch
        %439 = sbr.rel (%p437) target = $region48
      $region47: #{tpu_custom_call.1} parent=5 // pred_region
        %s440 = ssub.s32 %s15, 2
        // Predicated region
        $region49: #{tpu_custom_call.1} parent=47 // pred_check
          %p441 = pneg %p114
        $region50: #{tpu_custom_call.1} parent=47 // pred_check_branch
          %443 = sbr.rel (%p441) target = $region52
        $region51: #{tpu_custom_call.1} parent=47 // pred_region
          %s444 = sand.u32 %s99, 1
          %s445 = scalar_lea.sflag [#allocation6], %s444
          %s446 = sand.u32 %s99, 1
          %s447 = smul.addr %s446, 8
          %s448 = scalar_lea.vmem [#allocation9], %s447
          %449 = dma.done %s445, 128
        $region52: #{tpu_custom_call.1} parent=47 // pred_fallthru
          _
      $region48: #{tpu_custom_call.1} parent=5 // pred_fallthru
        _
    $region6: #{tpu_custom_call.1} parent=1 // loop_footer
      %s19 = sadd.s32 1, %s15
    $region7: #{tpu_custom_call.1} parent=1 // loop_footer_branch
      %14 = sbr.rel target = $region3
    $region8: #{tpu_custom_call.1} parent=1 // loop_exit
      _
    %450 = vsyncpa [#allocation5], 1
    %s451 = scalar_lea.sflag [#allocation5], 1
    %452 = vsyncpa %s451, 1
    %453 = vsyncpa [#allocation8], 1
    %454 = vsyncpa [#allocation6], 1
    %s455 = scalar_lea.sflag [#allocation6], 1
    %456 = vsyncpa %s455, 1

</llo_original>
